<compile_context>
chip_gen: v5e
topology: v5e:2x2
jax: 0.10.0
libtpu: 0.0.40
codegen_flags: <defaults>
</compile_context>

<pallas_src>
import functools

import jax
import jax.numpy as jnp
import numpy as np
from jax.experimental import pallas as pl
from jax.experimental.pallas import tpu as pltpu


def _round_up(x, m):
    return (x + m - 1) // m * m


def _cdiv(a, b):
    return (a + b - 1) // b


def _sigma_linear_kernel(x_ref, wt_ref, b_ref, y_ref, hess_ref, *,
                         b_total, tb, need_mask):
    """One batch tile: per-tile Gram partial (x^T x) and y = x @ W^T + b."""
    x = x_ref[...]                                       # (TB, D), native dtype

    if need_mask:
        # Zero the rows past the true batch size: contents of out-of-bounds
        # input-block rows are undefined, and they must not reach the Gram.
        i = pl.program_id(0)
        limit = b_total - i * tb
        rows = jax.lax.broadcasted_iota(jnp.int32, x.shape, 0)
        x = jnp.where(rows < limit, x, jnp.zeros_like(x))

    # Gram of this batch tile: contract over the batch dim on the MXU.
    gram = jax.lax.dot_general(
        x, x,
        dimension_numbers=(((0,), (0,)), ((), ())),
        preferred_element_type=jnp.float32,
    )                                                    # (D, D) f32
    hess_ref[...] = gram[None, :, :]

    # Wrapped Linear layer for this tile: y = x @ W^T + b.
    y = jnp.dot(x, wt_ref[...], preferred_element_type=jnp.float32) + b_ref[...]
    y_ref[...] = y.astype(y_ref.dtype)


def _choose_tb(B, D, H, itemsize, max_tb):
    # Cap double-buffered streamed bytes (x in + y out) around ~8 MiB so the
    # tiles fit comfortably under every generation's scoped-VMEM default.
    bytes_per_row = D * itemsize + H * itemsize
    cap = (8 * 1024 * 1024) // (2 * max(1, bytes_per_row))
    cap = max(8, (cap // 8) * 8)
    return max(8, min(max_tb, cap, _round_up(B, 8)))


def _build_forward(B, D, H, x_dtype, max_tb):
    """Builds a jitted forward for a fixed batch size B."""
    itemsize = jnp.dtype(x_dtype).itemsize
    TB = _choose_tb(B, D, H, itemsize, max_tb)
    num_tiles = _cdiv(B, TB)
    need_mask = (B % TB) != 0
    vmem = pltpu.MemorySpace.VMEM

    kernel = functools.partial(
        _sigma_linear_kernel, b_total=B, tb=TB, need_mask=need_mask)

    # Right-sized VMEM request: double-buffered streamed tiles + residents.
    vmem_need = (
        2 * TB * D * itemsize        # x tiles (double buffered)
        + 2 * TB * H * itemsize      # y tiles (double buffered)
        + 2 * D * D * 4              # Gram partial out block
        + 2 * D * H * 4              # W^T (resident)
        + 2 * 8 * max(H, 128) * 4    # bias tile
    )
    vmem_limit = int(min(32 * 1024 * 1024, max(16 * 1024 * 1024, 2 * vmem_need)))

    cost = pl.CostEstimate(
        flops=2 * B * D * D + 2 * B * D * H,
        transcendentals=0,
        bytes_accessed=(B * D * itemsize + B * H * itemsize
                        + D * H * 4 + H * 4 + num_tiles * D * D * 4),
    )

    call = pl.pallas_call(
        kernel,
        grid=(num_tiles,),
        in_specs=[
            pl.BlockSpec((TB, D), lambda i: (i, 0), memory_space=vmem),   # x tile
            pl.BlockSpec((D, H), lambda i: (0, 0), memory_space=vmem),    # W^T (resident)
            pl.BlockSpec((1, H), lambda i: (0, 0), memory_space=vmem),    # bias (resident)
        ],
        out_specs=(
            pl.BlockSpec((TB, H), lambda i: (i, 0), memory_space=vmem),       # y tile
            pl.BlockSpec((1, D, D), lambda i: (i, 0, 0), memory_space=vmem),  # Gram partial
        ),
        out_shape=(
            jax.ShapeDtypeStruct((B, H), x_dtype),
            jax.ShapeDtypeStruct((num_tiles, D, D), jnp.float32),
        ),
        compiler_params=pltpu.CompilerParams(
            dimension_semantics=("parallel",),   # independent tiles -> megacore-safe
            vmem_limit_bytes=vmem_limit,
        ),
        cost_estimate=cost,
    )

    def fwd(hess_old, x, wt, b2):
        y, partials = call(x, wt, b2)
        hess_inc = partials.sum(axis=0) + jnp.float32(1e-4) * jnp.eye(D, dtype=jnp.float32)
        return y, hess_old + hess_inc

    return jax.jit(fwd, donate_argnums=(0,))


class SigmaWrapper:
    """JAX/Pallas port of the PyTorch SigmaWrapper around a Linear(D, H) layer."""

    def __init__(self, W, b, max_tb=4096):
        H, D = W.shape
        self.D, self.H = D, H
        self.max_tb = int(max_tb)
        # Precompute W^T and a 2-D bias once (no per-call transpose dispatch).
        self.wt = jnp.transpose(jnp.asarray(W, jnp.float32))       # (D, H)
        self.b2 = jnp.asarray(b, jnp.float32).reshape(1, H)        # (1, H)
        self.hess = None    # running (D, D) f32 sum
        self.cnt = None
        self._fwd_cache = {}

    def get_stats(self):
        assert self.hess is not None
        return self.hess / self.cnt

    def _get_fwd(self, B, dtype):
        key = (B, jnp.dtype(dtype))
        if key not in self._fwd_cache:
            self._fwd_cache[key] = _build_forward(B, self.D, self.H, dtype, self.max_tb)
        return self._fwd_cache[key]

    def __call__(self, x):
        B, D = x.shape
        assert D == self.D
        if self.hess is None:
            self.cnt = 0
            self.hess = jnp.zeros((self.D, self.D), jnp.float32)
        fwd = self._get_fwd(B, x.dtype)
        y, self.hess = fwd(self.hess, x, self.wt, self.b2)
        self.cnt += B
        return y


if __name__ == "__main__":
    # Small deterministic shapes: in_features=32, out_features=64.
    B1, D, H = 8, 32, 64
    B2 = 300  # with max_tb=128 below: 3 batch tiles, masked 44-row tail tile
    key = jax.random.PRNGKey(0)
    kx1, kx2, kw, kb = jax.random.split(key, 4)

    x1 = jax.random.normal(kx1, (B1, D), dtype=jnp.float32)
    x2 = jax.random.normal(kx2, (B2, D), dtype=jnp.float32)
    W = jax.random.normal(kw, (H, D), dtype=jnp.float32) * (1.0 / np.sqrt(D))
    b = jax.random.normal(kb, (H,), dtype=jnp.float32) * 0.01

    # max_tb=128 keeps the demo small while exercising the multi-tile grid and
    # the in-kernel tail masking; production default is 4096.
    mod = SigmaWrapper(W, b, max_tb=128)
    y1 = jax.block_until_ready(mod(x1))
    y2 = jax.block_until_ready(mod(x2))
    hess = jax.block_until_ready(mod.hess)
    stats = jax.block_until_ready(mod.get_stats())

    # Pure-numpy reference (float64).
    xn1 = np.asarray(x1, np.float64)
    xn2 = np.asarray(x2, np.float64)
    Wn = np.asarray(W, np.float64)
    bn = np.asarray(b, np.float64)
    eye = np.eye(D)
    h_ref = (xn1.T @ xn1 + 1e-4 * eye) + (xn2.T @ xn2 + 1e-4 * eye)
    y1_ref = xn1 @ Wn.T + bn
    y2_ref = xn2 @ Wn.T + bn

    np.testing.assert_allclose(np.asarray(y1, np.float64), y1_ref, rtol=1e-5, atol=1e-4)
    np.testing.assert_allclose(np.asarray(y2, np.float64), y2_ref, rtol=1e-5, atol=1e-4)
    np.testing.assert_allclose(np.asarray(hess, np.float64), h_ref, rtol=1e-4, atol=1e-3)
    np.testing.assert_allclose(
        np.asarray(stats, np.float64), h_ref / (B1 + B2), rtol=1e-4, atol=1e-4
    )
    assert mod.cnt == B1 + B2

    print("KERNEL_OK")
</pallas_src>

<mosaic_0001>
module attributes {stable_mosaic.version = 11 : i64} {
  func.func @_sigma_linear_kernel(%arg0: i32, %arg1: memref<8x32xf32, #tpu.memory_space<vmem>>, %arg2: memref<32x64xf32, #tpu.memory_space<vmem>>, %arg3: memref<1x64xf32, #tpu.memory_space<vmem>>, %arg4: memref<8x64xf32, #tpu.memory_space<vmem>>, %arg5: memref<1x32x32xf32, #tpu.memory_space<vmem>>) attributes {dimension_semantics = [#tpu.dimension_semantics<parallel>], iteration_bounds = array<i64: 1>, scalar_prefetch = 0 : i64, scratch_operands = 0 : i64, tpu.core_type = #tpu.core_type<tc>, window_params = [{transform_indices = @transform_0, window_bounds = array<i64: 8, 32>}, {pipeline_mode = #tpu.pipeline_mode<synchronous>, transform_indices = @transform_1, window_bounds = array<i64: 32, 64>}, {pipeline_mode = #tpu.pipeline_mode<synchronous>, transform_indices = @transform_2, window_bounds = array<i64: 1, 64>}, {transform_indices = @transform_3, window_bounds = array<i64: 8, 64>}, {transform_indices = @transform_4, window_bounds = array<i64: 1, 32, 32>}]} {
    %c0 = arith.constant 0 : index
    %c0_0 = arith.constant 0 : index
    %0 = vector.load %arg1[%c0, %c0_0] : memref<8x32xf32, #tpu.memory_space<vmem>>, vector<8x32xf32>
    %cst = arith.constant dense<0.000000e+00> : vector<32x32xf32>
    %1 = tpu.matmul %0, %0, %cst {dimension_numbers = #tpu.dot_dimension_numbers<[0], [0], [1], [1], [0, 1, 1, 1], [], []>} : vector<8x32xf32>, vector<8x32xf32>, vector<32x32xf32> -> vector<32x32xf32>
    %2 = vector.shape_cast %1 : vector<32x32xf32> to vector<1x32x32xf32>
    %c0_1 = arith.constant 0 : index
    %c0_2 = arith.constant 0 : index
    %c0_3 = arith.constant 0 : index
    %3 = vector.load %arg5[%c0_1, %c0_2, %c0_3] : memref<1x32x32xf32, #tpu.memory_space<vmem>>, vector<1x32x32xf32>
    tpu.vector_store %arg5[%c0_1, %c0_2, %c0_3], %2 {strides = array<i32>} : memref<1x32x32xf32, #tpu.memory_space<vmem>>, vector<1x32x32xf32>,
    %c0_4 = arith.constant 0 : index
    %c0_5 = arith.constant 0 : index
    %4 = vector.load %arg2[%c0_4, %c0_5] : memref<32x64xf32, #tpu.memory_space<vmem>>, vector<32x64xf32>
    %cst_6 = arith.constant dense<0.000000e+00> : vector<8x64xf32>
    %5 = tpu.matmul %0, %4, %cst_6 {dimension_numbers = #tpu.dot_dimension_numbers<[1], [0], [0], [1], [0, 0, 1, 1], [], []>} : vector<8x32xf32>, vector<32x64xf32>, vector<8x64xf32> -> vector<8x64xf32>
    %c0_7 = arith.constant 0 : index
    %c0_8 = arith.constant 0 : index
    %6 = vector.load %arg3[%c0_7, %c0_8] : memref<1x64xf32, #tpu.memory_space<vmem>>, vector<1x64xf32>
    %7 = vector.broadcast %6 : vector<1x64xf32> to vector<8x64xf32>
    %8 = arith.addf %5, %7 : vector<8x64xf32>
    %c0_9 = arith.constant 0 : index
    %c0_10 = arith.constant 0 : index
    %9 = vector.load %arg4[%c0_9, %c0_10] : memref<8x64xf32, #tpu.memory_space<vmem>>, vector<8x64xf32>
    tpu.vector_store %arg4[%c0_9, %c0_10], %8 {strides = array<i32>} : memref<8x64xf32, #tpu.memory_space<vmem>>, vector<8x64xf32>,
    return
  }
  func.func @transform_0(%arg0: i32) -> (i32, i32) {
    %c0_i32 = arith.constant 0 : i32
    %c0_i32_0 = arith.constant 0 : i32
    return %arg0, %c0_i32 : i32, i32
  }
  func.func @transform_1(%arg0: i32) -> (i32, i32) {
    %c0_i32 = arith.constant 0 : i32
    %c0_i32_0 = arith.constant 0 : i32
    %c0_i32_1 = arith.constant 0 : i32
    return %c0_i32, %c0_i32_0 : i32, i32
  }
  func.func @transform_2(%arg0: i32) -> (i32, i32) {
    %c0_i32 = arith.constant 0 : i32
    %c0_i32_0 = arith.constant 0 : i32
    %c0_i32_1 = arith.constant 0 : i32
    return %c0_i32, %c0_i32_0 : i32, i32
  }
  func.func @transform_3(%arg0: i32) -> (i32, i32) {
    %c0_i32 = arith.constant 0 : i32
    %c0_i32_0 = arith.constant 0 : i32
    return %arg0, %c0_i32 : i32, i32
  }
  func.func @transform_4(%arg0: i32) -> (i32, i32, i32) {
    %c0_i32 = arith.constant 0 : i32
    %c0_i32_0 = arith.constant 0 : i32
    %c0_i32_1 = arith.constant 0 : i32
    return %arg0, %c0_i32, %c0_i32_0 : i32, i32, i32
  }
}

</mosaic_0001>

<llo_original>
// kernel: fwd.1
$region0: #{fwd.1}
  #allocation0 [shape = 'u32[]', space=smem, size = 0x4, offset = 0x4, fixed_abs, tag = 'smem constant byte address 0x4 - core index']
  #allocation1 [shape = 'u32[72,128]{1,0:T(1,128)}', space=vmem, size = 0x9000, scoped, tag = 'internal scratch']
  %s0 = inlined_call_operand.hbm [shape: f32[8,32], index: 0, kind: input, shape index: {}]
  %s1 = inlined_call_operand.hbm [shape: f32[32,64], index: 1, kind: input, shape index: {}]
  %s2 = inlined_call_operand.vmem [shape: f32[1,64], index: 2, kind: input, shape index: {}]
  %s3 = inlined_call_operand.hbm [shape: f32[8,64], index: 3, kind: output, shape index: {0}]
  %s4 = inlined_call_operand.vmem [shape: f32[1,32,32], index: 4, kind: output, shape index: {1}]
  %5 = xla_tuple %s3, %s4
  %s6 = sld [smem:[#allocation0]]
  $region38: #{fwd.1} parent=0
    _
  %s8 = ssub.s32 1, %s6
  %s9 = scalar_select 0, %s8, %s6
  $region1: #{fwd.1} parent=0
    #allocation2 [shape = 'u8[4096]{0}', space=vmem, size = 0x1000, scoped, tag = 'input window, operand 0, single buffered']
    #allocation3 [shape = 's32[1]{0}', space=sflag, size = 0x4, scoped, tag = 'scoped memory for fwd.1']
    #allocation4 [shape = 's32[1]{0}', space=sflag, size = 0x4, scoped, tag = 'scoped memory for fwd.1']
    #allocation5 [shape = 'u8[16384]{0}', space=vmem, size = 0x4000, scoped, tag = 'input window, operand 1, single buffered']
    #allocation6 [shape = 's32[1]{0}', space=sflag, size = 0x4, scoped, tag = 'scoped memory for fwd.1']
    #allocation7 [shape = 'u8[4096]{0}', space=vmem, size = 0x1000, scoped, tag = 'output window, operand 0, single buffered']
    %10 = vsyncpa [#allocation3], 0
    %11 = vsyncpa [#allocation6], 0
    %12 = vsyncpa [#allocation4], 0
    // Predicated region
    $region2: #{fwd.1} parent=1 // pred_check
      _
    $region3: #{fwd.1} parent=1 // pred_check_branch
      %14 = sbr.rel (0) target = $region5
    $region4: #{fwd.1} parent=1 // pred_region
      %16 = vsyncadd [#allocation3], 0
      %s18 = sshll.u32 %s0, 4
      %s19 = int_to_ptr.hbm [resolvable:$true] %s18
      %s20 = sshll.u32 [#allocation2], 4
      %s21 = int_to_ptr.vmem [resolvable:$true] %s20
      %23 = dma.hbm_to_vmem [thread:$0]  %s19, 128, %s21, [#allocation3]
    $region5: #{fwd.1} parent=1 // pred_fallthru
      _
    // Predicated region
    $region6: #{fwd.1} parent=1 // pred_check
      _
    $region7: #{fwd.1} parent=1 // pred_check_branch
      %25 = sbr.rel (0) target = $region9
    $region8: #{fwd.1} parent=1 // pred_region
      %27 = vsyncadd [#allocation6], 0
      %s28 = sshll.u32 %s1, 4
      %s29 = int_to_ptr.hbm [resolvable:$true] %s28
      %s30 = sshll.u32 [#allocation5], 4
      %s31 = int_to_ptr.vmem [resolvable:$true] %s30
      %36 = dma.hbm_to_vmem [thread:$0]  %s29, 512, %s31, [#allocation6], 128, 128, 8
    $region9: #{fwd.1} parent=1 // pred_fallthru
      _
    // Predicated region
    $region10: #{fwd.1} parent=1 // pred_check
      _
    $region11: #{fwd.1} parent=1 // pred_check_branch
      %38 = sbr.rel (0) target = $region13
    $region12: #{fwd.1} parent=1 // pred_region
      _
    $region13: #{fwd.1} parent=1 // pred_fallthru
      _
    // Predicated region
    $region14: #{fwd.1} parent=1 // pred_check
      _
    $region15: #{fwd.1} parent=1 // pred_check_branch
      %40 = sbr.rel (0) target = $region17
    $region16: #{fwd.1} parent=1 // pred_region
      %42 = dma.done [#allocation3], 128
    $region17: #{fwd.1} parent=1 // pred_fallthru
      _
    // Predicated region
    $region18: #{fwd.1} parent=1 // pred_check
      _
    $region19: #{fwd.1} parent=1 // pred_check_branch
      %44 = sbr.rel (0) target = $region21
    $region20: #{fwd.1} parent=1 // pred_region
      %46 = dma.done [#allocation6], 512
    $region21: #{fwd.1} parent=1 // pred_fallthru
      _
    %v47 = vld [vmem:[#allocation2] sm:$0xff]
    %48 = vxpose.xlu0.b32.start [1/16] %v47, 128
    %49 = vxpose.xlu0.b32.cont [2/16] 0.0, 128
    %50 = vxpose.xlu0.b32.cont [3/16] 0.0, 128
    %51 = vxpose.xlu0.b32.cont [4/16] 0.0, 128
    %52 = vxpose.xlu0.b32.cont [5/16] 0.0, 128
    %53 = vxpose.xlu0.b32.cont [6/16] 0.0, 128
    %54 = vxpose.xlu0.b32.cont [7/16] 0.0, 128
    %55 = vxpose.xlu0.b32.cont [8/16] 0.0, 128
    %56 = vxpose.xlu0.b32.cont [9/16] 0.0, 128
    %57 = vxpose.xlu0.b32.cont [10/16] 0.0, 128
    %58 = vxpose.xlu0.b32.cont [11/16] 0.0, 128
    %59 = vxpose.xlu0.b32.cont [12/16] 0.0, 128
    %60 = vxpose.xlu0.b32.cont [13/16] 0.0, 128
    %61 = vxpose.xlu0.b32.cont [14/16] 0.0, 128
    %62 = vxpose.xlu0.b32.cont [15/16] 0.0, 128
    %63 = vxpose.xlu0.b32.end [16/16] 0.0, 128
    %v64 = vpop.trf.xlu0
    %v65 = vpop.trf.xlu0
    %v66 = vpop.trf.xlu0
    %v67 = vpop.trf.xlu0
    %v68 = vpop.trf.xlu0
    %v69 = vpop.trf.xlu0
    %v70 = vpop.trf.xlu0
    %v71 = vpop.trf.xlu0
    %v72 = vpop.trf.xlu0
    %v73 = vpop.trf.xlu0
    %v74 = vpop.trf.xlu0
    %v75 = vpop.trf.xlu0
    %v76 = vpop.trf.xlu0
    %v77 = vpop.trf.xlu0
    %v78 = vpop.trf.xlu0
    %v79 = vpop.trf.xlu0
    %vm80 = vcmask 64512
    %v82 = vsel %vm80, %v64, 0
    %v85 = vsel %vm80, %v65, 0
    %v88 = vsel %vm80, %v66, 0
    %v91 = vsel %vm80, %v67, 0
    %93 = vmatpush.msra.mxu0 0.0
    %94 = vmatpush.msra.mxu0 0.0
    %95 = vmatpush.msra.mxu0 0.0
    %96 = vmatpush.msra.mxu0 0.0
    %97 = vmatpush.msra.mxu0 0.0
    %98 = vmatpush.msra.mxu0 0.0
    %99 = vmatpush.msra.mxu0 0.0
    %100 = vmatpush.msra.mxu0 0.0
    %101 = vmatpush.msra.mxu0 0.0
    %102 = vmatpush.msra.mxu0 0.0
    %103 = vmatpush.msra.mxu0 0.0
    %104 = vmatpush.msra.mxu0 0.0
    %105 = vmatpush.msra.mxu0 0.0
    %106 = vmatpush.msra.mxu0 0.0
    %107 = vmatpush.msra.mxu0 0.0
    %108 = vmatpush.msra.mxu0 %v47
    %109 = vmatmul.f32.gmra.mxu0 %v82
    %v110 = vpop.f32.mrf.mxu0
    %v111 = vadd.f32 0.0, %v110
    %112 = vmatmul.f32.gmra.mxu0 %v85
    %v113 = vpop.f32.mrf.mxu0
    %v114 = vadd.f32 0.0, %v113
    %115 = vmatmul.f32.gmra.mxu0 %v88
    %v116 = vpop.f32.mrf.mxu0
    %v117 = vadd.f32 0.0, %v116
    %118 = vmatmul.f32.gmra.mxu0 %v91
    %v119 = vpop.f32.mrf.mxu0
    %v120 = vadd.f32 0.0, %v119
    %121 = vdwg.mxu0
    %vm122 = vcmask 261120
    %123 = vst.msk [vmem:[%s4] sm:$0xff] %vm122, %v111
    %124 = vst.msk [vmem:[%s4 + $0x8] sm:$0xff] %vm122, %v114
    %125 = vst.msk [vmem:[%s4 + $0x10] sm:$0xff] %vm122, %v117
    %126 = vst.msk [vmem:[%s4 + $0x18] sm:$0xff] %vm122, %v120
    %v127 = vld [vmem:[#allocation5] sm:$0xff]
    %v128 = vld [vmem:[#allocation5 + $0x8] sm:$0xff]
    %v129 = vld [vmem:[#allocation5 + $0x10] sm:$0xff]
    %v130 = vld [vmem:[#allocation5 + $0x18] sm:$0xff]
    %v131 = vld [vmem:[%s2] sm:$0x1]
    %v133 = vperm.slane %v131, 0
    %v136 = vsel %vm122, %v47, 0
    %138 = vmatpush.msra.mxu0 0.0
    %139 = vmatpush.msra.mxu0 0.0
    %140 = vmatpush.msra.mxu0 0.0
    %141 = vmatpush.msra.mxu0 0.0
    %142 = vmatpush.msra.mxu0 0.0
    %143 = vmatpush.msra.mxu0 0.0
    %144 = vmatpush.msra.mxu0 0.0
    %145 = vmatpush.msra.mxu0 0.0
    %146 = vmatpush.msra.mxu0 0.0
    %147 = vmatpush.msra.mxu0 0.0
    %148 = vmatpush.msra.mxu0 0.0
    %149 = vmatpush.msra.mxu0 0.0
    %150 = vmatpush.msra.mxu0 %v130
    %151 = vmatpush.msra.mxu0 %v129
    %152 = vmatpush.msra.mxu0 %v128
    %153 = vmatpush.msra.mxu0 %v127
    %154 = vmatmul.f32.gmra.mxu0 %v136
    %v155 = vpop.f32.mrf.mxu0
    %v156 = vadd.f32 %v133, %v155
    %157 = vdwg.mxu0
    %vm158 = vcmask 523264
    %159 = vst.msk [vmem:[#allocation7] sm:$0xff] %vm158, %v156
    // Predicated region
    $region22: #{fwd.1} parent=1 // pred_check
      _
    $region23: #{fwd.1} parent=1 // pred_check_branch
      %161 = sbr.rel (0) target = $region25
    $region24: #{fwd.1} parent=1 // pred_region
      %163 = vsyncadd [#allocation4], 0
      %s165 = sshll.u32 [#allocation7], 4
      %s166 = int_to_ptr.vmem [resolvable:$true] %s165
      %s167 = sshll.u32 %s3, 4
      %s168 = int_to_ptr.hbm [resolvable:$true] %s167
      %170 = dma.vmem_to_hbm [thread:$0]  %s166, 128, %s168, [#allocation4]
    $region25: #{fwd.1} parent=1 // pred_fallthru
      _
    // Predicated region
    $region26: #{fwd.1} parent=1 // pred_check
      _
    $region27: #{fwd.1} parent=1 // pred_check_branch
      %172 = sbr.rel (0) target = $region29
    $region28: #{fwd.1} parent=1 // pred_region
      _
    $region29: #{fwd.1} parent=1 // pred_fallthru
      _
    // Predicated region
    $region30: #{fwd.1} parent=1 // pred_check
      _
    $region31: #{fwd.1} parent=1 // pred_check_branch
      %174 = sbr.rel (0) target = $region33
    $region32: #{fwd.1} parent=1 // pred_region
      %176 = dma.done [#allocation4], 128
    $region33: #{fwd.1} parent=1 // pred_fallthru
      _
    // Predicated region
    $region34: #{fwd.1} parent=1 // pred_check
      _
    $region35: #{fwd.1} parent=1 // pred_check_branch
      %178 = sbr.rel (0) target = $region37
    $region36: #{fwd.1} parent=1 // pred_region
      _
    $region37: #{fwd.1} parent=1 // pred_fallthru
      _
    %179 = vsyncpa [#allocation3], 1
    %180 = vsyncpa [#allocation6], 1
    %181 = vsyncpa [#allocation4], 1

</llo_original>
